<compile_context>
chip_gen: v5e
topology: v5e:2x2
jax: 0.10.0
libtpu: 0.0.40
codegen_flags: <defaults>
</compile_context>

<pallas_src>
import functools

import jax
import jax.numpy as jnp
from jax.experimental import pallas as pl
from jax.experimental.pallas import tpu as pltpu


def _round_up(x, m):
    return ((x + m - 1) // m) * m


def _pick_tile(dim, pref):
    """Whole (128-padded) dim if it fits under `pref`, else `pref` (mult of 128)."""
    padded = _round_up(dim, 128)
    return padded if padded <= pref else pref


def _node_tiles(num_nodes):
    """Row tile, node-contraction tile, padded node count."""
    n128 = _round_up(num_nodes, 128)
    if n128 <= 1024:
        t_rows = t_src = n128
    else:
        t_rows, t_src = 1024, 512
    n_pad = _round_up(num_nodes, t_rows)      # divisible by both tiles
    return t_rows, t_src, n_pad


def padded_num_nodes(num_nodes):
    """Node-dim padding the kernels want; lets callers pre-build a padded adjacency."""
    return _node_tiles(num_nodes)[2]


def _matmul_epilogue_kernel(*refs, apply_relu, has_bias, has_row_scale):
    """acc += A_blk @ B_blk over k; optional (+bias | +deg*b, relu) on finalize."""
    idx = 0
    a_ref = refs[idx]; idx += 1
    b_ref = refs[idx]; idx += 1
    bias_ref = None
    scale_ref = None
    if has_bias:
        bias_ref = refs[idx]; idx += 1
    if has_row_scale:
        scale_ref = refs[idx]; idx += 1
    o_ref, acc_ref = refs[idx], refs[idx + 1]

    k = pl.program_id(2)

    @pl.when(k == 0)
    def _():
        acc_ref[...] = jnp.zeros_like(acc_ref)

    # bf16 x bf16 operands straight into the MXU, f32 accumulation.
    acc_ref[...] += jnp.dot(a_ref[...], b_ref[...],
                            preferred_element_type=jnp.float32)

    @pl.when(k == pl.num_programs(2) - 1)
    def _():
        r = acc_ref[...]
        if has_bias:
            bias = bias_ref[...]                   # [1, tn]
            if has_row_scale:
                bias = scale_ref[...] * bias       # [tm,1]*[1,tn] -> [tm,tn]
            r = r + bias
        if apply_relu:
            r = jnp.maximum(r, 0.0)
        o_ref[...] = r.astype(o_ref.dtype)


def _tiled_matmul(a, b, bias=None, row_scale=None, *, apply_relu=False,
                  tm, tn, tk, out_dtype=jnp.float32):
    """out = epilogue(a @ b); shapes must already be padded to the tiles."""
    M, K = a.shape
    K2, N = b.shape
    assert K == K2 and M % tm == 0 and N % tn == 0 and K % tk == 0
    gi, gj, gk = M // tm, N // tn, K // tk
    has_bias = bias is not None
    has_row_scale = row_scale is not None
    assert not (has_row_scale and not has_bias)

    in_specs = [
        pl.BlockSpec((tm, tk), lambda i, j, k: (i, k)),   # A
        pl.BlockSpec((tk, tn), lambda i, j, k: (k, j)),   # B
    ]
    inputs = [a, b]
    if has_bias:
        in_specs.append(pl.BlockSpec((1, tn), lambda i, j, k: (0, j)))
        inputs.append(bias.reshape(1, N).astype(jnp.float32))
    if has_row_scale:
        in_specs.append(pl.BlockSpec((tm, 1), lambda i, j, k: (i, 0)))
        inputs.append(row_scale.reshape(M, 1).astype(jnp.float32))

    kernel = functools.partial(
        _matmul_epilogue_kernel, apply_relu=apply_relu,
        has_bias=has_bias, has_row_scale=has_row_scale)

    out_itemsize = jnp.dtype(out_dtype).itemsize
    # A is streamed once per j block, B once per i block; output written once.
    bytes_accessed = int(
        a.size * a.dtype.itemsize * gj
        + b.size * b.dtype.itemsize * gi
        + M * N * out_itemsize
        + (N * 4 * gi if has_bias else 0)
        + (M * 4 * gj if has_row_scale else 0))

    return pl.pallas_call(
        kernel,
        out_shape=jax.ShapeDtypeStruct((M, N), out_dtype),
        grid_spec=pltpu.PrefetchScalarGridSpec(
            num_scalar_prefetch=0,
            grid=(gi, gj, gk),
            in_specs=in_specs,
            out_specs=pl.BlockSpec((tm, tn), lambda i, j, k: (i, j)),
            scratch_shapes=[pltpu.VMEM((tm, tn), jnp.float32)],
        ),
        compiler_params=pltpu.CompilerParams(
            dimension_semantics=("parallel", "parallel", "arbitrary"),
            vmem_limit_bytes=32 * 1024 * 1024,
        ),
        cost_estimate=pl.CostEstimate(
            flops=2 * M * N * K,
            transcendentals=0,
            bytes_accessed=bytes_accessed,
        ),
    )(*inputs)


def graph_convolution(adj, x, weight, bias):
    """relu(adj @ (x @ weight.T + bias))  — the GraphConvolution forward.

    adj:    [N, N] or [n_pad, n_pad]  dense adjacency, adj[dst, src] = #edges src->dst
            (bf16 and pre-padded preferred; padded/cast once here otherwise)
    x:      [N, Fin]    node features
    weight: [Fout, Fin] nn.Linear weight
    bias:   [Fout]      nn.Linear bias
    """
    N, Fin = x.shape
    Fout = weight.shape[0]

    t_rows, t_src, n_pad = _node_tiles(N)
    t_fin = _pick_tile(Fin, 512)
    t_fout = _pick_tile(Fout, 512)
    fin_pad = _round_up(Fin, t_fin)
    fout_pad = _round_up(Fout, t_fout)

    # Contract the dominant N^2 matmul over the narrower feature dim.
    reorder = Fin < Fout

    # Megacore (v7x): make sure the N^2 matmul has >= 2 parallel blocks.
    j_blocks = (fin_pad // t_fin) if reorder else (fout_pad // t_fout)
    if (n_pad // t_rows) * j_blocks < 2 and n_pad >= 256:
        t_rows = n_pad // 2          # still a multiple of 8, divides n_pad

    # At most one padded bf16 materialization of the N^2 adjacency.
    an = adj.shape[0]
    if an == n_pad and adj.dtype == jnp.bfloat16:
        adj_p = adj
    elif an >= n_pad:
        adj_p = adj[:n_pad, :n_pad].astype(jnp.bfloat16)
    else:
        adj_p = jnp.zeros((n_pad, n_pad), jnp.bfloat16).at[:an, :an].set(
            adj.astype(jnp.bfloat16))

    # bf16 operands (MXU fast path); zero padding keeps the math exact:
    # padded adjacency columns are zero, so bias-valued padded rows of the
    # intermediate never contribute; padded output rows/cols are sliced off.
    x_p = jnp.zeros((n_pad, fin_pad), jnp.bfloat16).at[:N, :Fin].set(
        x.astype(jnp.bfloat16))
    wt_p = jnp.zeros((fin_pad, fout_pad), jnp.bfloat16).at[:Fin, :Fout].set(
        weight.T.astype(jnp.bfloat16))
    b_p = jnp.zeros((fout_pad,), jnp.float32).at[:Fout].set(
        bias.astype(jnp.float32))

    if not reorder:
        # Stage 1: H = X @ W^T + b   (bf16 intermediate, f32 accumulate)
        h = _tiled_matmul(x_p, wt_p, b_p, apply_relu=False,
                          tm=t_rows, tn=t_fout, tk=t_fin,
                          out_dtype=jnp.bfloat16)
        # Stage 2: out = relu(A @ H)
        out = _tiled_matmul(adj_p, h, apply_relu=True,
                            tm=t_rows, tn=t_fout, tk=t_src,
                            out_dtype=jnp.float32)
    else:
        # Stage 1: T = A @ X   (contract over nodes, narrow Fin output)
        t = _tiled_matmul(adj_p, x_p, apply_relu=False,
                          tm=t_rows, tn=t_fin, tk=t_src,
                          out_dtype=jnp.bfloat16)
        # Stage 2: out = relu(T @ W^T + deg(A) (x) b)   (bias folded as rank-1)
        deg = jnp.sum(adj_p, axis=1, keepdims=True, dtype=jnp.float32)
        out = _tiled_matmul(t, wt_p, b_p, row_scale=deg, apply_relu=True,
                            tm=t_rows, tn=t_fout, tk=t_fin,
                            out_dtype=jnp.float32)
    return out[:N, :Fout]


def edges_to_dense_adj(src, dst, num_nodes, pad_to=None):
    """DGL copy_u + sum aggregation == dense A with A[dst, src] += 1.

    Scatters straight into a (padded) bf16 buffer — exact for edge
    multiplicities <= 256 — so the N^2 object is materialized only once.
    """
    n = num_nodes if pad_to is None else pad_to
    adj = jnp.zeros((n, n), dtype=jnp.bfloat16)
    return adj.at[dst, src].add(jnp.bfloat16(1.0))


# TODO(synk): for genuinely sparse graphs, replace the dense A @ H stage with a
# PrefetchScalarGridSpec CSR gather-and-accumulate kernel (only real edges).


if __name__ == "__main__":
    key = jax.random.PRNGKey(0)
    k_x, k_w, k_b, k_w2, k_b2 = jax.random.split(key, 5)

    N = 16          # number of nodes
    IN_FEATS = 32
    OUT_FEATS = 32

    # Deterministic small graph: a ring (i -> i+1) plus self-loops.
    src = jnp.concatenate([jnp.arange(N), jnp.arange(N)])
    dst = jnp.concatenate([(jnp.arange(N) + 1) % N, jnp.arange(N)])
    n_pad = padded_num_nodes(N)
    adj = edges_to_dense_adj(src, dst, N, pad_to=n_pad)        # padded bf16
    adj_f32 = adj[:N, :N].astype(jnp.float32)                  # reference copy

    # --- case 1: Fin == Fout (standard A @ (X W^T + b) path) ---------------
    x = jax.random.normal(k_x, (N, IN_FEATS), dtype=jnp.float32)
    weight = 0.1 * jax.random.normal(k_w, (OUT_FEATS, IN_FEATS), dtype=jnp.float32)
    bias = 0.1 * jax.random.normal(k_b, (OUT_FEATS,), dtype=jnp.float32)

    out = graph_convolution(adj, x, weight, bias)
    out = jax.block_until_ready(out)

    ref = jax.nn.relu(adj_f32 @ (x @ weight.T + bias))
    assert out.shape == (N, OUT_FEATS)
    assert jnp.allclose(out, ref, atol=5e-2, rtol=5e-2), \
        float(jnp.max(jnp.abs(out - ref)))

    # --- case 2: Fin < Fout (reordered (A X) W^T + deg*b path) -------------
    IN2, OUT2 = 16, 48
    x2 = jax.random.normal(k_x, (N, IN2), dtype=jnp.float32)
    weight2 = 0.1 * jax.random.normal(k_w2, (OUT2, IN2), dtype=jnp.float32)
    bias2 = 0.1 * jax.random.normal(k_b2, (OUT2,), dtype=jnp.float32)

    out2 = graph_convolution(adj, x2, weight2, bias2)
    out2 = jax.block_until_ready(out2)

    ref2 = jax.nn.relu(adj_f32 @ (x2 @ weight2.T + bias2))
    assert out2.shape == (N, OUT2)
    assert jnp.allclose(out2, ref2, atol=5e-2, rtol=5e-2), \
        float(jnp.max(jnp.abs(out2 - ref2)))

    print("KERNEL_OK")
</pallas_src>

<mosaic_0001>
module attributes {stable_mosaic.version = 11 : i64} {
  func.func @_matmul_epilogue_kernel(%arg0: i32, %arg1: i32, %arg2: i32, %arg3: memref<128x128xbf16, #tpu.memory_space<vmem>>, %arg4: memref<128x128xbf16, #tpu.memory_space<vmem>>, %arg5: memref<1x128xf32, #tpu.memory_space<vmem>>, %arg6: memref<128x128xbf16, #tpu.memory_space<vmem>>, %arg7: memref<128x128xf32, #tpu.memory_space<vmem>>) attributes {dimension_semantics = [#tpu.dimension_semantics<parallel>, #tpu.dimension_semantics<parallel>, #tpu.dimension_semantics<arbitrary>], iteration_bounds = array<i64: 1, 1, 1>, scalar_prefetch = 0 : i64, scratch_operands = 1 : i64, tpu.core_type = #tpu.core_type<tc>, window_params = [{transform_indices = @transform_0, window_bounds = array<i64: 128, 128>}, {transform_indices = @transform_1, window_bounds = array<i64: 128, 128>}, {transform_indices = @transform_2, window_bounds = array<i64: 1, 128>}, {transform_indices = @transform_3, window_bounds = array<i64: 128, 128>}]} {
    %c0_i32 = arith.constant 0 : i32
    %0 = arith.cmpi eq, %arg2, %c0_i32 : i32
    %1 = arith.extui %0 : i1 to i32
    %c0_i32_0 = arith.constant 0 : i32
    %2 = arith.cmpi ne, %1, %c0_i32_0 : i32
    scf.if %2 {
      %cst_10 = arith.constant 0.000000e+00 : f32
      %12 = vector.broadcast %cst_10 : f32 to vector<128x128xf32>
      %c0_11 = arith.constant 0 : index
      %c0_12 = arith.constant 0 : index
      %13 = vector.load %arg7[%c0_11, %c0_12] : memref<128x128xf32, #tpu.memory_space<vmem>>, vector<128x128xf32>
      tpu.vector_store %arg7[%c0_11, %c0_12], %12 {strides = array<i32>} : memref<128x128xf32, #tpu.memory_space<vmem>>, vector<128x128xf32>,
    } else {
    }
    %c0 = arith.constant 0 : index
    %c0_1 = arith.constant 0 : index
    %3 = vector.load %arg7[%c0, %c0_1] : memref<128x128xf32, #tpu.memory_space<vmem>>, vector<128x128xf32>
    %c0_2 = arith.constant 0 : index
    %c0_3 = arith.constant 0 : index
    %4 = vector.load %arg3[%c0_2, %c0_3] : memref<128x128xbf16, #tpu.memory_space<vmem>>, vector<128x128xbf16>
    %c0_4 = arith.constant 0 : index
    %c0_5 = arith.constant 0 : index
    %5 = vector.load %arg4[%c0_4, %c0_5] : memref<128x128xbf16, #tpu.memory_space<vmem>>, vector<128x128xbf16>
    %cst = arith.constant dense<0.000000e+00> : vector<128x128xf32>
    %6 = tpu.matmul %4, %5, %cst {dimension_numbers = #tpu.dot_dimension_numbers<[1], [0], [0], [1], [0, 0, 1, 1], [], []>} : vector<128x128xbf16>, vector<128x128xbf16>, vector<128x128xf32> -> vector<128x128xf32>
    %7 = arith.addf %3, %6 : vector<128x128xf32>
    %c0_6 = arith.constant 0 : index
    %c0_7 = arith.constant 0 : index
    %8 = vector.load %arg7[%c0_6, %c0_7] : memref<128x128xf32, #tpu.memory_space<vmem>>, vector<128x128xf32>
    tpu.vector_store %arg7[%c0_6, %c0_7], %7 {strides = array<i32>} : memref<128x128xf32, #tpu.memory_space<vmem>>, vector<128x128xf32>,
    %c0_i32_8 = arith.constant 0 : i32
    %9 = arith.cmpi eq, %arg2, %c0_i32_8 : i32
    %10 = arith.extui %9 : i1 to i32
    %c0_i32_9 = arith.constant 0 : i32
    %11 = arith.cmpi ne, %10, %c0_i32_9 : i32
    scf.if %11 {
      %c0_10 = arith.constant 0 : index
      %c0_11 = arith.constant 0 : index
      %12 = vector.load %arg7[%c0_10, %c0_11] : memref<128x128xf32, #tpu.memory_space<vmem>>, vector<128x128xf32>
      %c0_12 = arith.constant 0 : index
      %c0_13 = arith.constant 0 : index
      %13 = vector.load %arg5[%c0_12, %c0_13] : memref<1x128xf32, #tpu.memory_space<vmem>>, vector<1x128xf32>
      %14 = vector.broadcast %13 : vector<1x128xf32> to vector<128x128xf32>
      %15 = arith.addf %12, %14 : vector<128x128xf32>
      %16 = arith.truncf %15 : vector<128x128xf32> to vector<128x128xbf16>
      %c0_14 = arith.constant 0 : index
      %c0_15 = arith.constant 0 : index
      %17 = vector.load %arg6[%c0_14, %c0_15] : memref<128x128xbf16, #tpu.memory_space<vmem>>, vector<128x128xbf16>
      tpu.vector_store %arg6[%c0_14, %c0_15], %16 {strides = array<i32>} : memref<128x128xbf16, #tpu.memory_space<vmem>>, vector<128x128xbf16>,
    } else {
    }
    return
  }
  func.func @transform_0(%arg0: i32, %arg1: i32, %arg2: i32) -> (i32, i32) {
    %c0_i32 = arith.constant 0 : i32
    return %arg0, %arg2 : i32, i32
  }
  func.func @transform_1(%arg0: i32, %arg1: i32, %arg2: i32) -> (i32, i32) {
    %c0_i32 = arith.constant 0 : i32
    return %arg2, %arg1 : i32, i32
  }
  func.func @transform_2(%arg0: i32, %arg1: i32, %arg2: i32) -> (i32, i32) {
    %c0_i32 = arith.constant 0 : i32
    %c0_i32_0 = arith.constant 0 : i32
    return %c0_i32, %arg1 : i32, i32
  }
  func.func @transform_3(%arg0: i32, %arg1: i32, %arg2: i32) -> (i32, i32) {
    %c0_i32 = arith.constant 0 : i32
    return %arg0, %arg1 : i32, i32
  }
}

</mosaic_0001>

<llo_original>
// kernel: tpu_custom_call.1
$region0: #{tpu_custom_call.1}
  #allocation0 [shape = 'u32[]', space=smem, size = 0x4, offset = 0x4, fixed_abs, tag = 'smem constant byte address 0x4 - core index']
  #allocation1 [shape = 'u32[72,128]{1,0:T(1,128)}', space=vmem, size = 0x9000, scoped, tag = 'internal scratch']
  #allocation2 [shape = 'f32[128,128]{1,0:T(8,128)}', space=vmem, size = 0x10000, scoped, tag = 'scratch operand']
  %s0 = inlined_call_operand.hbm [shape: bf16[128,128], index: 0, kind: input, shape index: {}]
  %s1 = inlined_call_operand.hbm [shape: bf16[128,128], index: 1, kind: input, shape index: {}]
  %s2 = inlined_call_operand.vmem [shape: f32[1,128], index: 2, kind: input, shape index: {}]
  %s3 = inlined_call_operand.hbm [shape: bf16[128,128], index: 3, kind: output, shape index: {}]
  %s4 = sld [smem:[#allocation0]]
  $region38: #{tpu_custom_call.1} parent=0
    _
  %s6 = ssub.s32 1, %s4
  %s7 = scalar_select 0, %s6, %s4
  $region1: #{tpu_custom_call.1} parent=0
    #allocation3 [shape = 'u8[32768]{0}', space=vmem, size = 0x8000, scoped, tag = 'input window, operand 0, single buffered']
    #allocation4 [shape = 's32[1]{0}', space=sflag, size = 0x4, scoped, tag = 'scoped memory for tpu_custom_call.1']
    #allocation5 [shape = 's32[1]{0}', space=sflag, size = 0x4, scoped, tag = 'scoped memory for tpu_custom_call.1']
    #allocation6 [shape = 'u8[32768]{0}', space=vmem, size = 0x8000, scoped, tag = 'input window, operand 1, single buffered']
    #allocation7 [shape = 's32[1]{0}', space=sflag, size = 0x4, scoped, tag = 'scoped memory for tpu_custom_call.1']
    #allocation8 [shape = 'u8[32768]{0}', space=vmem, size = 0x8000, scoped, tag = 'output window, operand 0, single buffered']
    %8 = vsyncpa [#allocation4], 0
    %9 = vsyncpa [#allocation7], 0
    %10 = vsyncpa [#allocation5], 0
    // Predicated region
    $region2: #{tpu_custom_call.1} parent=1 // pred_check
      _
    $region3: #{tpu_custom_call.1} parent=1 // pred_check_branch
      %12 = sbr.rel (0) target = $region5
    $region4: #{tpu_custom_call.1} parent=1 // pred_region
      %14 = vsyncadd [#allocation4], 0
      %s15 = sshll.u32 %s0, 4
      %s16 = int_to_ptr.hbm [resolvable:$true] %s15
      %s17 = sshll.u32 [#allocation3], 4
      %s18 = int_to_ptr.vmem [resolvable:$true] %s17
      %23 = dma.hbm_to_vmem [thread:$0]  %s16, 1024, %s18, [#allocation4], 64, 64, 4
    $region5: #{tpu_custom_call.1} parent=1 // pred_fallthru
      _
    // Predicated region
    $region6: #{tpu_custom_call.1} parent=1 // pred_check
      _
    $region7: #{tpu_custom_call.1} parent=1 // pred_check_branch
      %25 = sbr.rel (0) target = $region9
    $region8: #{tpu_custom_call.1} parent=1 // pred_region
      %27 = vsyncadd [#allocation7], 0
      %s28 = sshll.u32 %s1, 4
      %s29 = int_to_ptr.hbm [resolvable:$true] %s28
      %s30 = sshll.u32 [#allocation6], 4
      %s31 = int_to_ptr.vmem [resolvable:$true] %s30
      %36 = dma.hbm_to_vmem [thread:$0]  %s29, 1024, %s31, [#allocation7], 64, 64, 4
    $region9: #{tpu_custom_call.1} parent=1 // pred_fallthru
      _
    // Predicated region
    $region10: #{tpu_custom_call.1} parent=1 // pred_check
      _
    $region11: #{tpu_custom_call.1} parent=1 // pred_check_branch
      %38 = sbr.rel (0) target = $region13
    $region12: #{tpu_custom_call.1} parent=1 // pred_region
      _
    $region13: #{tpu_custom_call.1} parent=1 // pred_fallthru
      _
    // Predicated region
    $region14: #{tpu_custom_call.1} parent=1 // pred_check
      _
    $region15: #{tpu_custom_call.1} parent=1 // pred_check_branch
      %40 = sbr.rel (0) target = $region17
    $region16: #{tpu_custom_call.1} parent=1 // pred_region
      %42 = dma.done [#allocation4], 1024
    $region17: #{tpu_custom_call.1} parent=1 // pred_fallthru
      _
    // Predicated region
    $region18: #{tpu_custom_call.1} parent=1 // pred_check
      _
    $region19: #{tpu_custom_call.1} parent=1 // pred_check_branch
      %44 = sbr.rel (0) target = $region21
    $region20: #{tpu_custom_call.1} parent=1 // pred_region
      %46 = dma.done [#allocation7], 1024
    $region21: #{tpu_custom_call.1} parent=1 // pred_fallthru
      _
    %p47 = scmp.eq.s32.totalorder 0, 0
    // Predicated region
    $region22: #{tpu_custom_call.1} parent=1 // pred_check
      %p48 = pneg %p47
    $region23: #{tpu_custom_call.1} parent=1 // pred_check_branch
      %50 = sbr.rel (%p48) target = $region25
    $region24: #{tpu_custom_call.1} parent=1 // pred_region
      %51 = vst [vmem:[#allocation2] sm:$0xff] 0.0
      %52 = vst [vmem:[#allocation2 + $0x8] sm:$0xff] 0.0
      %53 = vst [vmem:[#allocation2 + $0x10] sm:$0xff] 0.0
      %54 = vst [vmem:[#allocation2 + $0x18] sm:$0xff] 0.0
      %55 = vst [vmem:[#allocation2 + $0x20] sm:$0xff] 0.0
      %56 = vst [vmem:[#allocation2 + $0x28] sm:$0xff] 0.0
      %57 = vst [vmem:[#allocation2 + $0x30] sm:$0xff] 0.0
      %58 = vst [vmem:[#allocation2 + $0x38] sm:$0xff] 0.0
      %59 = vst [vmem:[#allocation2 + $0x40] sm:$0xff] 0.0
      %60 = vst [vmem:[#allocation2 + $0x48] sm:$0xff] 0.0
      %61 = vst [vmem:[#allocation2 + $0x50] sm:$0xff] 0.0
      %62 = vst [vmem:[#allocation2 + $0x58] sm:$0xff] 0.0
      %63 = vst [vmem:[#allocation2 + $0x60] sm:$0xff] 0.0
      %64 = vst [vmem:[#allocation2 + $0x68] sm:$0xff] 0.0
      %65 = vst [vmem:[#allocation2 + $0x70] sm:$0xff] 0.0
      %66 = vst [vmem:[#allocation2 + $0x78] sm:$0xff] 0.0
    $region25: #{tpu_custom_call.1} parent=1 // pred_fallthru
      _
    %v67 = vld [vmem:[#allocation2] sm:$0xff]
    %v68 = vld [vmem:[#allocation2 + $0x8] sm:$0xff]
    %v69 = vld [vmem:[#allocation2 + $0x10] sm:$0xff]
    %v70 = vld [vmem:[#allocation2 + $0x18] sm:$0xff]
    %v71 = vld [vmem:[#allocation2 + $0x20] sm:$0xff]
    %v72 = vld [vmem:[#allocation2 + $0x28] sm:$0xff]
    %v73 = vld [vmem:[#allocation2 + $0x30] sm:$0xff]
    %v74 = vld [vmem:[#allocation2 + $0x38] sm:$0xff]
    %v75 = vld [vmem:[#allocation2 + $0x40] sm:$0xff]
    %v76 = vld [vmem:[#allocation2 + $0x48] sm:$0xff]
    %v77 = vld [vmem:[#allocation2 + $0x50] sm:$0xff]
    %v78 = vld [vmem:[#allocation2 + $0x58] sm:$0xff]
    %v79 = vld [vmem:[#allocation2 + $0x60] sm:$0xff]
    %v80 = vld [vmem:[#allocation2 + $0x68] sm:$0xff]
    %v81 = vld [vmem:[#allocation2 + $0x70] sm:$0xff]
    %v82 = vld [vmem:[#allocation2 + $0x78] sm:$0xff]
    %v83 = vld [vmem:[#allocation3] sm:$0xf]
    %v84 = vld [vmem:[#allocation3 + $0x4] sm:$0xf]
    %v85 = vld [vmem:[#allocation3 + $0x8] sm:$0xf]
    %v86 = vld [vmem:[#allocation3 + $0xc] sm:$0xf]
    %v87 = vld [vmem:[#allocation3 + $0x10] sm:$0xf]
    %v88 = vld [vmem:[#allocation3 + $0x14] sm:$0xf]
    %v89 = vld [vmem:[#allocation3 + $0x18] sm:$0xf]
    %v90 = vld [vmem:[#allocation3 + $0x1c] sm:$0xf]
    %v91 = vld [vmem:[#allocation3 + $0x20] sm:$0xf]
    %v92 = vld [vmem:[#allocation3 + $0x24] sm:$0xf]
    %v93 = vld [vmem:[#allocation3 + $0x28] sm:$0xf]
    %v94 = vld [vmem:[#allocation3 + $0x2c] sm:$0xf]
    %v95 = vld [vmem:[#allocation3 + $0x30] sm:$0xf]
    %v96 = vld [vmem:[#allocation3 + $0x34] sm:$0xf]
    %v97 = vld [vmem:[#allocation3 + $0x38] sm:$0xf]
    %v98 = vld [vmem:[#allocation3 + $0x3c] sm:$0xf]
    %v99 = vld [vmem:[#allocation6] sm:$0xf]
    %v100 = vld [vmem:[#allocation6 + $0x4] sm:$0xf]
    %v101 = vld [vmem:[#allocation6 + $0x8] sm:$0xf]
    %v102 = vld [vmem:[#allocation6 + $0xc] sm:$0xf]
    %v103 = vld [vmem:[#allocation6 + $0x10] sm:$0xf]
    %v104 = vld [vmem:[#allocation6 + $0x14] sm:$0xf]
    %v105 = vld [vmem:[#allocation6 + $0x18] sm:$0xf]
    %v106 = vld [vmem:[#allocation6 + $0x1c] sm:$0xf]
    %v107 = vld [vmem:[#allocation6 + $0x20] sm:$0xf]
    %v108 = vld [vmem:[#allocation6 + $0x24] sm:$0xf]
    %v109 = vld [vmem:[#allocation6 + $0x28] sm:$0xf]
    %v110 = vld [vmem:[#allocation6 + $0x2c] sm:$0xf]
    %v111 = vld [vmem:[#allocation6 + $0x30] sm:$0xf]
    %v112 = vld [vmem:[#allocation6 + $0x34] sm:$0xf]
    %v113 = vld [vmem:[#allocation6 + $0x38] sm:$0xf]
    %v114 = vld [vmem:[#allocation6 + $0x3c] sm:$0xf]
    %v131 = vunpack.c.l.b16 %v83
    %v132 = vunpack.c.l.b16 %v84
    %v133 = vunpack.c.l.b16 %v85
    %v134 = vunpack.c.l.b16 %v86
    %v135 = vunpack.c.l.b16 %v87
    %v136 = vunpack.c.l.b16 %v88
    %v137 = vunpack.c.l.b16 %v89
    %v138 = vunpack.c.l.b16 %v90
    %v139 = vunpack.c.l.b16 %v91
    %v140 = vunpack.c.l.b16 %v92
    %v141 = vunpack.c.l.b16 %v93
    %v142 = vunpack.c.l.b16 %v94
    %v143 = vunpack.c.l.b16 %v95
    %v144 = vunpack.c.l.b16 %v96
    %v145 = vunpack.c.l.b16 %v97
    %v146 = vunpack.c.l.b16 %v98
    %v147 = vpack.c.b16 %v132, %v131
    %v148 = vpack.c.b16 %v134, %v133
    %v149 = vpack.c.b16 %v136, %v135
    %v150 = vpack.c.b16 %v138, %v137
    %v151 = vpack.c.b16 %v140, %v139
    %v152 = vpack.c.b16 %v142, %v141
    %v153 = vpack.c.b16 %v144, %v143
    %v154 = vpack.c.b16 %v146, %v145
    %v179 = vunpack.c.l.b16 %v99
    %v180 = vunpack.c.l.b16 %v100
    %v181 = vunpack.c.l.b16 %v101
    %v182 = vunpack.c.l.b16 %v102
    %v183 = vunpack.c.l.b16 %v103
    %v184 = vunpack.c.l.b16 %v104
    %v185 = vunpack.c.l.b16 %v105
    %v186 = vunpack.c.l.b16 %v106
    %v187 = vunpack.c.l.b16 %v107
    %v188 = vunpack.c.l.b16 %v108
    %v189 = vunpack.c.l.b16 %v109
    %v190 = vunpack.c.l.b16 %v110
    %v191 = vunpack.c.l.b16 %v111
    %v192 = vunpack.c.l.b16 %v112
    %v193 = vunpack.c.l.b16 %v113
    %v194 = vunpack.c.l.b16 %v114
    %v195 = vpack.c.b16 %v180, %v179
    %v196 = vpack.c.b16 %v182, %v181
    %v197 = vpack.c.b16 %v184, %v183
    %v198 = vpack.c.b16 %v186, %v185
    %v199 = vpack.c.b16 %v188, %v187
    %v200 = vpack.c.b16 %v190, %v189
    %v201 = vpack.c.b16 %v192, %v191
    %v202 = vpack.c.b16 %v194, %v193
    %211 = vmatpush.bf16.msra.mxu0 %v202
    %212 = vmatpush.bf16.msra.mxu0 %v201
    %213 = vmatpush.bf16.msra.mxu0 %v200
    %214 = vmatpush.bf16.msra.mxu0 %v199
    %215 = vmatpush.bf16.msra.mxu0 %v198
    %216 = vmatpush.bf16.msra.mxu0 %v197
    %217 = vmatpush.bf16.msra.mxu0 %v196
    %218 = vmatpush.bf16.msra.mxu0 %v195
    %219 = vmatmul.bf16.gmra.mxu0 %v147
    %v220 = vpop.f32.mrf.mxu0
    %v221 = vadd.f32 0.0, %v220
    %v222 = vpop.f32.mrf.mxu0
    %v223 = vadd.f32 0.0, %v222
    %224 = vmatmul.bf16.gmra.mxu0 %v148
    %v225 = vpop.f32.mrf.mxu0
    %v226 = vadd.f32 0.0, %v225
    %v227 = vpop.f32.mrf.mxu0
    %v228 = vadd.f32 0.0, %v227
    %229 = vmatmul.bf16.gmra.mxu0 %v149
    %v230 = vpop.f32.mrf.mxu0
    %v231 = vadd.f32 0.0, %v230
    %v232 = vpop.f32.mrf.mxu0
    %v233 = vadd.f32 0.0, %v232
    %234 = vmatmul.bf16.gmra.mxu0 %v150
    %v235 = vpop.f32.mrf.mxu0
    %v236 = vadd.f32 0.0, %v235
    %v237 = vpop.f32.mrf.mxu0
    %v238 = vadd.f32 0.0, %v237
    %239 = vmatmul.bf16.gmra.mxu0 %v151
    %v240 = vpop.f32.mrf.mxu0
    %v241 = vadd.f32 0.0, %v240
    %v242 = vpop.f32.mrf.mxu0
    %v243 = vadd.f32 0.0, %v242
    %244 = vmatmul.bf16.gmra.mxu0 %v152
    %v245 = vpop.f32.mrf.mxu0
    %v246 = vadd.f32 0.0, %v245
    %v247 = vpop.f32.mrf.mxu0
    %v248 = vadd.f32 0.0, %v247
    %249 = vmatmul.bf16.gmra.mxu0 %v153
    %v250 = vpop.f32.mrf.mxu0
    %v251 = vadd.f32 0.0, %v250
    %v252 = vpop.f32.mrf.mxu0
    %v253 = vadd.f32 0.0, %v252
    %254 = vmatmul.bf16.gmra.mxu0 %v154
    %v255 = vpop.f32.mrf.mxu0
    %v256 = vadd.f32 0.0, %v255
    %v257 = vpop.f32.mrf.mxu0
    %v258 = vadd.f32 0.0, %v257
    %259 = vdwg.mxu0
    %v260 = vadd.f32 %v67, %v221
    %v261 = vadd.f32 %v68, %v223
    %v262 = vadd.f32 %v69, %v226
    %v263 = vadd.f32 %v70, %v228
    %v264 = vadd.f32 %v71, %v231
    %v265 = vadd.f32 %v72, %v233
    %v266 = vadd.f32 %v73, %v236
    %v267 = vadd.f32 %v74, %v238
    %v268 = vadd.f32 %v75, %v241
    %v269 = vadd.f32 %v76, %v243
    %v270 = vadd.f32 %v77, %v246
    %v271 = vadd.f32 %v78, %v248
    %v272 = vadd.f32 %v79, %v251
    %v273 = vadd.f32 %v80, %v253
    %v274 = vadd.f32 %v81, %v256
    %v275 = vadd.f32 %v82, %v258
    %276 = vst [vmem:[#allocation2] sm:$0xff] %v260
    %277 = vst [vmem:[#allocation2 + $0x8] sm:$0xff] %v261
    %278 = vst [vmem:[#allocation2 + $0x10] sm:$0xff] %v262
    %279 = vst [vmem:[#allocation2 + $0x18] sm:$0xff] %v263
    %280 = vst [vmem:[#allocation2 + $0x20] sm:$0xff] %v264
    %281 = vst [vmem:[#allocation2 + $0x28] sm:$0xff] %v265
    %282 = vst [vmem:[#allocation2 + $0x30] sm:$0xff] %v266
    %283 = vst [vmem:[#allocation2 + $0x38] sm:$0xff] %v267
    %284 = vst [vmem:[#allocation2 + $0x40] sm:$0xff] %v268
    %285 = vst [vmem:[#allocation2 + $0x48] sm:$0xff] %v269
    %286 = vst [vmem:[#allocation2 + $0x50] sm:$0xff] %v270
    %287 = vst [vmem:[#allocation2 + $0x58] sm:$0xff] %v271
    %288 = vst [vmem:[#allocation2 + $0x60] sm:$0xff] %v272
    %289 = vst [vmem:[#allocation2 + $0x68] sm:$0xff] %v273
    %290 = vst [vmem:[#allocation2 + $0x70] sm:$0xff] %v274
    %291 = vst [vmem:[#allocation2 + $0x78] sm:$0xff] %v275
    // Predicated region
    $region26: #{tpu_custom_call.1} parent=1 // pred_check
      %p292 = pneg %p47
    $region27: #{tpu_custom_call.1} parent=1 // pred_check_branch
      %294 = sbr.rel (%p292) target = $region29
    $region28: #{tpu_custom_call.1} parent=1 // pred_region
      %v295 = vld [vmem:[#allocation2] sm:$0xff]
      %v296 = vld [vmem:[#allocation2 + $0x8] sm:$0xff]
      %v297 = vld [vmem:[#allocation2 + $0x10] sm:$0xff]
      %v298 = vld [vmem:[#allocation2 + $0x18] sm:$0xff]
      %v299 = vld [vmem:[#allocation2 + $0x20] sm:$0xff]
      %v300 = vld [vmem:[#allocation2 + $0x28] sm:$0xff]
      %v301 = vld [vmem:[#allocation2 + $0x30] sm:$0xff]
      %v302 = vld [vmem:[#allocation2 + $0x38] sm:$0xff]
      %v303 = vld [vmem:[#allocation2 + $0x40] sm:$0xff]
      %v304 = vld [vmem:[#allocation2 + $0x48] sm:$0xff]
      %v305 = vld [vmem:[#allocation2 + $0x50] sm:$0xff]
      %v306 = vld [vmem:[#allocation2 + $0x58] sm:$0xff]
      %v307 = vld [vmem:[#allocation2 + $0x60] sm:$0xff]
      %v308 = vld [vmem:[#allocation2 + $0x68] sm:$0xff]
      %v309 = vld [vmem:[#allocation2 + $0x70] sm:$0xff]
      %v310 = vld [vmem:[#allocation2 + $0x78] sm:$0xff]
      %v311 = vld [vmem:[%s2] sm:$0x1]
      %v313 = vperm.slane %v311, 0
      %v315 = vadd.f32 %v295, %v313
      %v316 = vadd.f32 %v296, %v313
      %v317 = vadd.f32 %v297, %v313
      %v318 = vadd.f32 %v298, %v313
      %v319 = vadd.f32 %v299, %v313
      %v320 = vadd.f32 %v300, %v313
      %v321 = vadd.f32 %v301, %v313
      %v322 = vadd.f32 %v302, %v313
      %v323 = vadd.f32 %v303, %v313
      %v324 = vadd.f32 %v304, %v313
      %v325 = vadd.f32 %v305, %v313
      %v326 = vadd.f32 %v306, %v313
      %v327 = vadd.f32 %v307, %v313
      %v328 = vadd.f32 %v308, %v313
      %v329 = vadd.f32 %v309, %v313
      %v330 = vadd.f32 %v310, %v313
      %v331 = vpack.c.bf16 %v315, %v315
      %v332 = vpack.c.bf16 %v316, %v316
      %v333 = vpack.c.bf16 %v317, %v317
      %v334 = vpack.c.bf16 %v318, %v318
      %v335 = vpack.c.bf16 %v319, %v319
      %v336 = vpack.c.bf16 %v320, %v320
      %v337 = vpack.c.bf16 %v321, %v321
      %v338 = vpack.c.bf16 %v322, %v322
      %v339 = vpack.c.bf16 %v323, %v323
      %v340 = vpack.c.bf16 %v324, %v324
      %v341 = vpack.c.bf16 %v325, %v325
      %v342 = vpack.c.bf16 %v326, %v326
      %v343 = vpack.c.bf16 %v327, %v327
      %v344 = vpack.c.bf16 %v328, %v328
      %v345 = vpack.c.bf16 %v329, %v329
      %v346 = vpack.c.bf16 %v330, %v330
      %347 = vst [vmem:[#allocation8] sm:$0xf] %v331
      %348 = vst [vmem:[#allocation8 + $0x4] sm:$0xf] %v332
      %349 = vst [vmem:[#allocation8 + $0x8] sm:$0xf] %v333
      %350 = vst [vmem:[#allocation8 + $0xc] sm:$0xf] %v334
      %351 = vst [vmem:[#allocation8 + $0x10] sm:$0xf] %v335
      %352 = vst [vmem:[#allocation8 + $0x14] sm:$0xf] %v336
      %353 = vst [vmem:[#allocation8 + $0x18] sm:$0xf] %v337
      %354 = vst [vmem:[#allocation8 + $0x1c] sm:$0xf] %v338
      %355 = vst [vmem:[#allocation8 + $0x20] sm:$0xf] %v339
      %356 = vst [vmem:[#allocation8 + $0x24] sm:$0xf] %v340
      %357 = vst [vmem:[#allocation8 + $0x28] sm:$0xf] %v341
      %358 = vst [vmem:[#allocation8 + $0x2c] sm:$0xf] %v342
      %359 = vst [vmem:[#allocation8 + $0x30] sm:$0xf] %v343
      %360 = vst [vmem:[#allocation8 + $0x34] sm:$0xf] %v344
      %361 = vst [vmem:[#allocation8 + $0x38] sm:$0xf] %v345
      %362 = vst [vmem:[#allocation8 + $0x3c] sm:$0xf] %v346
    $region29: #{tpu_custom_call.1} parent=1 // pred_fallthru
      _
    // Predicated region
    $region30: #{tpu_custom_call.1} parent=1 // pred_check
      _
    $region31: #{tpu_custom_call.1} parent=1 // pred_check_branch
      %364 = sbr.rel (0) target = $region33
    $region32: #{tpu_custom_call.1} parent=1 // pred_region
      %366 = vsyncadd [#allocation5], 0
      %s367 = sshll.u32 [#allocation8], 4
      %s368 = int_to_ptr.vmem [resolvable:$true] %s367
      %s369 = sshll.u32 %s3, 4
      %s370 = int_to_ptr.hbm [resolvable:$true] %s369
      %375 = dma.vmem_to_hbm [thread:$0]  %s368, 1024, %s370, [#allocation5], 64, 64, 4
    $region33: #{tpu_custom_call.1} parent=1 // pred_fallthru
      _
    // Predicated region
    $region34: #{tpu_custom_call.1} parent=1 // pred_check
      _
    $region35: #{tpu_custom_call.1} parent=1 // pred_check_branch
      %377 = sbr.rel (0) target = $region37
    $region36: #{tpu_custom_call.1} parent=1 // pred_region
      %379 = dma.done [#allocation5], 1024
    $region37: #{tpu_custom_call.1} parent=1 // pred_fallthru
      _
    %380 = vsyncpa [#allocation4], 1
    %381 = vsyncpa [#allocation7], 1
    %382 = vsyncpa [#allocation5], 1

</llo_original>
